<compile_context>
chip_gen: v7x
topology: tpu7x:2x2x1
jax: 0.10.0
libtpu: 0.0.40
codegen_flags: <defaults>
</compile_context>

<pallas_src>
import functools

import jax
import jax.numpy as jnp
import numpy as np
from jax.experimental import pallas as pl
from jax.experimental.pallas import tpu as pltpu


# ----------------------------------------------------------------------------
# Kernels
# ----------------------------------------------------------------------------
def _onehot_matmul_kernel(idx_ref, emb_ref, out_ref, *, vocab):
    # idx_ref : (Bb, 1)  int32   block of batch indices
    # emb_ref : (V, Dp)  float32 full table, resident in VMEM (same block every step)
    # out_ref : (Bb, Dp) float32 lane-dense output block
    idx = idx_ref[...]                                           # (Bb, 1)
    bb = idx.shape[0]
    iota = jax.lax.broadcasted_iota(jnp.int32, (bb, vocab), 1)   # (Bb, V)
    onehot = (iota == idx).astype(emb_ref.dtype)                 # exact 0/1
    out = jnp.dot(onehot, emb_ref[...],
                  preferred_element_type=jnp.float32)            # MXU gather
    out_ref[...] = out.astype(out_ref.dtype)


def _dma_gather_kernel(idx_ref, table_ref, out_ref, copy_sems, *, block_b):
    # idx_ref   : (Bp,)    int32, SMEM (scalar-prefetched indices)
    # table_ref : (V, Dp)  HBM ref (memory_space=pl.ANY) -- never copied wholesale
    # out_ref   : (Bb, Dp) VMEM output block (DMA destination)
    # copy_sems : (Bb,)    DMA semaphores
    base = pl.program_id(0) * block_b
    # Issue all row DMAs for this batch block, then drain them.
    for r in range(block_b):                       # static unroll
        row = idx_ref[base + r]
        pltpu.make_async_copy(table_ref.at[pl.ds(row, 1)],
                              out_ref.at[pl.ds(r, 1)],
                              copy_sems.at[r]).start()
    for r in range(block_b):
        pltpu.make_async_copy(table_ref.at[pl.ds(0, 1)],
                              out_ref.at[pl.ds(r, 1)],
                              copy_sems.at[r]).wait()


# ----------------------------------------------------------------------------
# Wrappers
# ----------------------------------------------------------------------------
def _round_up(x, m):
    return ((x + m - 1) // m) * m


def _default_block_b():
    """Per-generation batch block: fill the MXU M dimension (128 on <=v5, 256 on v6e/v7x)."""
    try:
        kind = jax.devices()[0].device_kind.lower()
    except Exception:
        return 128
    for tag in ("v2", "v3", "v4", "v5"):
        if tag in kind:
            return 128
    return 256


def _onehot_call(idx2d, table, grid, bb, Bp, V, Dp, table_bytes):
    dtype = table.dtype
    ce = pl.CostEstimate(
        flops=2 * Bp * V * Dp,
        transcendentals=0,
        bytes_accessed=Bp * 4 + table_bytes + Bp * Dp * dtype.itemsize,
    )
    # Table is double-buffered by the default pipeliner even though its block
    # index is constant; budget VMEM for 2x table + in/out blocks + margin,
    # never below the default 32 MiB scoped limit.
    vmem_limit = int(min(100 << 20,
                         max(32 << 20,
                             2 * table_bytes + 4 * bb * Dp * dtype.itemsize + (4 << 20))))
    return pl.pallas_call(
        functools.partial(_onehot_matmul_kernel, vocab=V),
        out_shape=jax.ShapeDtypeStruct((Bp, Dp), dtype),
        grid=grid,
        in_specs=[
            pl.BlockSpec((bb, 1), lambda b: (b, 0)),     # index block
            pl.BlockSpec((V, Dp), lambda b: (0, 0)),     # full table, reused every step
        ],
        out_specs=pl.BlockSpec((bb, Dp), lambda b: (b, 0)),
        compiler_params=pltpu.CompilerParams(
            dimension_semantics=("parallel",),
            vmem_limit_bytes=vmem_limit,
        ),
        cost_estimate=ce,
    )(idx2d, table)


def _gather_call(idx1d, table, grid, bb, Bp, Dp):
    dtype = table.dtype
    ce = pl.CostEstimate(
        flops=0,
        transcendentals=0,
        bytes_accessed=Bp * 4 + 2 * Bp * Dp * dtype.itemsize,
    )
    return pl.pallas_call(
        functools.partial(_dma_gather_kernel, block_b=bb),
        out_shape=jax.ShapeDtypeStruct((Bp, Dp), dtype),
        grid_spec=pltpu.PrefetchScalarGridSpec(
            num_scalar_prefetch=1,                        # indices -> SMEM
            grid=grid,
            in_specs=[pl.BlockSpec(memory_space=pl.ANY)], # table stays in HBM
            out_specs=pl.BlockSpec((bb, Dp), lambda b, idx: (b, 0)),
            scratch_shapes=[pltpu.SemaphoreType.DMA((bb,))],
        ),
        compiler_params=pltpu.CompilerParams(dimension_semantics=("arbitrary",)),
        cost_estimate=ce,
    )(idx1d, table)


def ticker_embedding_lookup(indices, emb_table, *, block_b=None, use_gather=None):
    """indices: (B,) int32, emb_table: (V, D) float32 -> (B, D) float32."""
    indices = jnp.asarray(indices, jnp.int32).reshape(-1)
    B = int(indices.shape[0])
    V, D = emb_table.shape
    Dp = _round_up(D, 128)                               # lane-dense output / full MXU N
    table_bytes = V * Dp * emb_table.dtype.itemsize

    if use_gather is None:
        # One-hot matmul only while the table is small; otherwise DMA gather.
        use_gather = (V > 2048) or (table_bytes > (8 << 20))

    if block_b is None:
        block_b = 32 if use_gather else _default_block_b()

    Bp0 = _round_up(max(B, 1), 8)
    bb = min(block_b, Bp0)
    # Keep >= 2 grid steps when cheap so v7x's two TensorCores both get work.
    if Bp0 // bb < 2 and bb >= 16 and bb % 16 == 0:
        bb //= 2
    Bp = _round_up(Bp0, bb)

    # Zero padding: row 0 is always a valid index; padded rows are sliced off.
    idx_pad = jnp.pad(indices, (0, Bp - B))
    table_p = emb_table if Dp == D else jnp.pad(emb_table, ((0, 0), (0, Dp - D)))

    grid = (Bp // bb,)
    if use_gather:
        out = _gather_call(idx_pad, table_p, grid, bb, Bp, Dp)
    else:
        out = _onehot_call(idx_pad.reshape(Bp, 1), table_p, grid, bb, Bp, V, Dp, table_bytes)
    return out[:B, :D]


class TickerEmbedding:
    """JAX/Pallas port of the PyTorch TickerEmbedding module."""

    def __init__(self, ticker_list, ticker_embedding_dim, key):
        self.embedding_dict = {t: i for i, t in enumerate(ticker_list)}
        # nn.Embedding default init: N(0, 1)
        self.embedding_weight = jax.random.normal(
            key, (len(ticker_list), ticker_embedding_dim), jnp.float32)

    def __call__(self, tickers):
        # TODO(synk): string -> index dict lookup is host-side Python; no TPU equivalent.
        idx = jnp.asarray([self.embedding_dict[t] for t in tickers], jnp.int32)
        return ticker_embedding_lookup(idx, self.embedding_weight)

    def reference(self, tickers):
        idx = jnp.asarray([self.embedding_dict[t] for t in tickers], jnp.int32)
        return jnp.take(self.embedding_weight, idx, axis=0)


if __name__ == "__main__":
    # Small deterministic example: 16-ticker vocab, 32-dim embeddings, batch of 8.
    ticker_list = [f"TCK{i:02d}" for i in range(16)]
    emb_dim = 32

    key = jax.random.PRNGKey(0)
    module = TickerEmbedding(ticker_list, emb_dim, key)

    tickers = ["TCK03", "TCK00", "TCK15", "TCK07", "TCK03", "TCK12", "TCK01", "TCK09"]
    idx = jnp.asarray([module.embedding_dict[t] for t in tickers], jnp.int32)
    ref = module.reference(tickers)

    # Path 1: one-hot MXU gather (auto-selected for this small vocab).
    out = jax.block_until_ready(module(tickers))
    np.testing.assert_allclose(np.asarray(out), np.asarray(ref), rtol=1e-6, atol=1e-6)
    assert out.shape == (len(tickers), emb_dim)

    # Path 2: scalar-prefetch DMA gather (auto-selected for large vocabs; forced here).
    out_g = jax.block_until_ready(
        ticker_embedding_lookup(idx, module.embedding_weight, use_gather=True))
    np.testing.assert_allclose(np.asarray(out_g), np.asarray(ref), rtol=1e-6, atol=1e-6)

    print("KERNEL_OK")
</pallas_src>

<mosaic_0001>
module attributes {stable_mosaic.version = 11 : i64} {
  func.func @_onehot_matmul_kernel(%arg0: i32, %arg1: memref<8x1xi32, #tpu.memory_space<vmem>>, %arg2: memref<16x128xf32, #tpu.memory_space<vmem>>, %arg3: memref<8x128xf32, #tpu.memory_space<vmem>>) attributes {dimension_semantics = [#tpu.dimension_semantics<parallel>], iteration_bounds = array<i64: 1>, scalar_prefetch = 0 : i64, scratch_operands = 0 : i64, tpu.core_type = #tpu.core_type<tc>, window_params = [{transform_indices = @transform_0, window_bounds = array<i64: 8, 1>}, {pipeline_mode = #tpu.pipeline_mode<synchronous>, transform_indices = @transform_1, window_bounds = array<i64: 16, 128>}, {transform_indices = @transform_2, window_bounds = array<i64: 8, 128>}]} {
    %c0 = arith.constant 0 : index
    %c0_0 = arith.constant 0 : index
    %0 = vector.load %arg1[%c0, %c0_0] : memref<8x1xi32, #tpu.memory_space<vmem>>, vector<8x1xi32>
    %1 = tpu.iota {dimensions = array<i32: 1>} : vector<8x16xi32>
    %2 = vector.broadcast %0 : vector<8x1xi32> to vector<8x16xi32>
    %3 = arith.cmpi eq, %1, %2 : vector<8x16xi32>
    %4 = arith.extui %3 : vector<8x16xi1> to vector<8x16xi32>
    %5 = arith.sitofp %4 : vector<8x16xi32> to vector<8x16xf32>
    %c0_1 = arith.constant 0 : index
    %c0_2 = arith.constant 0 : index
    %6 = vector.load %arg2[%c0_1, %c0_2] : memref<16x128xf32, #tpu.memory_space<vmem>>, vector<16x128xf32>
    %cst = arith.constant dense<0.000000e+00> : vector<8x128xf32>
    %7 = tpu.matmul %5, %6, %cst {dimension_numbers = #tpu.dot_dimension_numbers<[1], [0], [0], [1], [0, 0, 1, 1], [], []>} : vector<8x16xf32>, vector<16x128xf32>, vector<8x128xf32> -> vector<8x128xf32>
    %c0_3 = arith.constant 0 : index
    %c0_4 = arith.constant 0 : index
    %8 = vector.load %arg3[%c0_3, %c0_4] : memref<8x128xf32, #tpu.memory_space<vmem>>, vector<8x128xf32>
    tpu.vector_store %arg3[%c0_3, %c0_4], %7 {strides = array<i32>} : memref<8x128xf32, #tpu.memory_space<vmem>>, vector<8x128xf32>,
    return
  }
  func.func @transform_0(%arg0: i32) -> (i32, i32) {
    %c0_i32 = arith.constant 0 : i32
    %c0_i32_0 = arith.constant 0 : i32
    return %arg0, %c0_i32 : i32, i32
  }
  func.func @transform_1(%arg0: i32) -> (i32, i32) {
    %c0_i32 = arith.constant 0 : i32
    %c0_i32_0 = arith.constant 0 : i32
    %c0_i32_1 = arith.constant 0 : i32
    return %c0_i32, %c0_i32_0 : i32, i32
  }
  func.func @transform_2(%arg0: i32) -> (i32, i32) {
    %c0_i32 = arith.constant 0 : i32
    %c0_i32_0 = arith.constant 0 : i32
    return %arg0, %c0_i32 : i32, i32
  }
}

</mosaic_0001>

<llo_original>
// kernel: tpu_custom_call.1
$region0: #{tpu_custom_call.1}
  #allocation0 [shape = 'u32[]', space=smem, size = 0x4, offset = 0x4, fixed_abs, tag = 'smem constant byte address 0x4 - core index']
  #allocation1 [shape = 'u32[144,128]{1,0:T(1,128)}', space=vmem, size = 0x12000, scoped, tag = 'internal scratch']
  %s0 = inlined_call_operand.vmem [shape: s32[8,1], index: 0, kind: input, shape index: {}]
  %s1 = inlined_call_operand.hbm [shape: f32[16,128], index: 1, kind: input, shape index: {}]
  %s2 = inlined_call_operand.hbm [shape: f32[8,128], index: 2, kind: output, shape index: {}]
  %s3 = sld [smem:[#allocation0]]
  $region22: #{tpu_custom_call.1} parent=0
    _
  %s5 = ssub.s32 1, %s3
  %s6 = scalar_select 0, %s5, %s3
  $region1: #{tpu_custom_call.1} parent=0
    #allocation2 [shape = 'u8[8192]{0}', space=vmem, size = 0x2000, scoped, tag = 'input window, operand 1, single buffered']
    #allocation3 [shape = 's32[1]{0}', space=sflag, size = 0x4, scoped, tag = 'scoped memory for tpu_custom_call.1']
    #allocation4 [shape = 's32[1]{0}', space=sflag, size = 0x4, scoped, tag = 'scoped memory for tpu_custom_call.1']
    #allocation5 [shape = 'u8[4096]{0}', space=vmem, size = 0x1000, scoped, tag = 'output window, operand 0, single buffered']
    %7 = vsyncpa [#allocation3], 0
    %8 = vsyncpa [#allocation4], 0
    // Predicated region
    $region2: #{tpu_custom_call.1} parent=1 // pred_check
      _
    $region3: #{tpu_custom_call.1} parent=1 // pred_check_branch
      %10 = sbr.rel (0) target = $region5
    $region4: #{tpu_custom_call.1} parent=1 // pred_region
      _
    $region5: #{tpu_custom_call.1} parent=1 // pred_fallthru
      _
    // Predicated region
    $region6: #{tpu_custom_call.1} parent=1 // pred_check
      _
    $region7: #{tpu_custom_call.1} parent=1 // pred_check_branch
      %12 = sbr.rel (0) target = $region9
    $region8: #{tpu_custom_call.1} parent=1 // pred_region
      %s14 = ssub.s32 256, 256
      %15 = vsyncadd [#allocation3], %s14
      %s16 = sshll.u32 [#allocation2], 4
      %s17 = int_to_ptr.vmem [resolvable:$true] %s16
      %22 = dma.hbm_to_vmem [thread:$0]  %s1, 256, %s17, [#allocation3], 128, 128, 8
    $region9: #{tpu_custom_call.1} parent=1 // pred_fallthru
      _
    // Predicated region
    $region10: #{tpu_custom_call.1} parent=1 // pred_check
      _
    $region11: #{tpu_custom_call.1} parent=1 // pred_check_branch
      %24 = sbr.rel (0) target = $region13
    $region12: #{tpu_custom_call.1} parent=1 // pred_region
      %25 = dma.done [#allocation3], 256
    $region13: #{tpu_custom_call.1} parent=1 // pred_fallthru
      _
    %v26 = vld [vmem:[%s0] sm:$0xff]
    %v27 = vlaneseq
    %v28 = vand.u32 %v27, 127
    %29 = vset.pattern.permute.xlu0 0
    %30 = vperm.xlu0 %29, %v26
    %v31 = vpop.permute.xlu0 %30
    %vm32 = vcmp.eq.s32.totalorder %v28, %v31
    %v33 = vsel %vm32, 1, 0
    %v34 = vcvt.s32.f32 %v33
    %v35 = vld [vmem:[#allocation2] sm:$0xff]
    %v36 = vld [vmem:[#allocation2 + $0x8] sm:$0xff]
    %vm37 = vcmask 130048
    %v39 = vsel %vm37, %v34, 0
    %41 = vmatprep.subr.mxu0 0.0
    %42 = vmatpush1.msra.mxu0 %v35
    %43 = vmatprep.subr.mxu0 0.0
    %44 = vmatpush1.msra.mxu0 %v36
    %45 = vmatprep.subr.mxu0 0.0
    %46 = vmatpush1.msra.mxu0 0.0
    %47 = vmatprep.subr.mxu0 0.0
    %48 = vmatpush1.msra.mxu0 0.0
    %49 = vmatprep.subr.mxu0 0.0
    %50 = vmatpush1.msra.mxu0 0.0
    %51 = vmatprep.subr.mxu0 0.0
    %52 = vmatpush1.msra.mxu0 0.0
    %53 = vmatprep.subr.mxu0 0.0
    %54 = vmatpush1.msra.mxu0 0.0
    %55 = vmatprep.subr.mxu0 0.0
    %56 = vmatpush1.msra.mxu0 0.0
    %57 = vmatprep.subr.mxu0 0.0
    %58 = vmatpush1.msra.mxu0 0.0
    %59 = vmatprep.subr.mxu0 0.0
    %60 = vmatpush1.msra.mxu0 0.0
    %61 = vmatprep.subr.mxu0 0.0
    %62 = vmatpush1.msra.mxu0 0.0
    %63 = vmatprep.subr.mxu0 0.0
    %64 = vmatpush1.msra.mxu0 0.0
    %65 = vmatprep.subr.mxu0 0.0
    %66 = vmatpush1.msra.mxu0 0.0
    %67 = vmatprep.subr.mxu0 0.0
    %68 = vmatpush1.msra.mxu0 0.0
    %69 = vmatprep.subr.mxu0 0.0
    %70 = vmatpush1.msra.mxu0 0.0
    %71 = vmatprep.subr.mxu0 0.0
    %72 = vmatpush1.msra.mxu0 0.0
    %73 = vmatprep.subr.mxu0 0.0
    %74 = vmatpush1.msra.mxu0 0.0
    %75 = vmatprep.subr.mxu0 0.0
    %76 = vmatpush1.msra.mxu0 0.0
    %77 = vmatprep.subr.mxu0 0.0
    %78 = vmatpush1.msra.mxu0 0.0
    %79 = vmatprep.subr.mxu0 0.0
    %80 = vmatpush1.msra.mxu0 0.0
    %81 = vmatprep.subr.mxu0 0.0
    %82 = vmatpush1.msra.mxu0 0.0
    %83 = vmatprep.subr.mxu0 0.0
    %84 = vmatpush1.msra.mxu0 0.0
    %85 = vmatprep.subr.mxu0 0.0
    %86 = vmatpush1.msra.mxu0 0.0
    %87 = vmatprep.subr.mxu0 0.0
    %88 = vmatpush1.msra.mxu0 0.0
    %89 = vmatprep.subr.mxu0 0.0
    %90 = vmatpush1.msra.mxu0 0.0
    %91 = vmatprep.subr.mxu0 0.0
    %92 = vmatpush1.msra.mxu0 0.0
    %93 = vmatprep.subr.mxu0 0.0
    %94 = vmatpush1.msra.mxu0 0.0
    %95 = vmatprep.subr.mxu0 0.0
    %96 = vmatpush1.msra.mxu0 0.0
    %97 = vmatprep.subr.mxu0 0.0
    %98 = vmatpush1.msra.mxu0 0.0
    %99 = vmatprep.subr.mxu0 0.0
    %100 = vmatpush1.msra.mxu0 0.0
    %101 = vmatprep.subr.mxu0 0.0
    %102 = vmatpush1.msra.mxu0 0.0
    %103 = vmatprep.subr.mxu0 0.0
    %104 = vmatpush1.msra.mxu0 0.0
    %105 = vmatprep.mubr.f32.mxu0 0.0
    %106 = vmatmul.mubr.f32.gmra.mrb[0].mxu0 %v39
    %v107 = vpop.f32.mrb[0].mxu0
    %v108 = vadd.f32 0.0, %v107
    %v109 = vpop.f32.mrb[0].mxu0
    %110 = vdwg.mxu0
    %111 = vst [vmem:[#allocation5] sm:$0xff] %v108
    // Predicated region
    $region14: #{tpu_custom_call.1} parent=1 // pred_check
      _
    $region15: #{tpu_custom_call.1} parent=1 // pred_check_branch
      %113 = sbr.rel (0) target = $region17
    $region16: #{tpu_custom_call.1} parent=1 // pred_region
      %s115 = ssub.s32 128, 128
      %116 = vsyncadd [#allocation4], %s115
      %s118 = sshll.u32 [#allocation5], 4
      %s119 = int_to_ptr.vmem [resolvable:$true] %s118
      %121 = dma.vmem_to_hbm [thread:$0]  %s119, 128, %s2, [#allocation4]
    $region17: #{tpu_custom_call.1} parent=1 // pred_fallthru
      _
    // Predicated region
    $region18: #{tpu_custom_call.1} parent=1 // pred_check
      _
    $region19: #{tpu_custom_call.1} parent=1 // pred_check_branch
      %123 = sbr.rel (0) target = $region21
    $region20: #{tpu_custom_call.1} parent=1 // pred_region
      %124 = dma.done [#allocation4], 128
    $region21: #{tpu_custom_call.1} parent=1 // pred_fallthru
      _
    %125 = vsyncpa [#allocation3], 1
    %126 = vsyncpa [#allocation4], 1

</llo_original>
